<compile_context>
chip_gen: v6e
topology: v6e:2x2x1
jax: 0.10.0
libtpu: 0.0.40
codegen_flags: <defaults>
</compile_context>

<pallas_src>
import jax
import jax.numpy as jnp
from jax.experimental import pallas as pl
from jax.experimental.pallas import tpu as pltpu


def _make_conv_relu_kernel(H, WC, KH):
    """Per-image conv+bias+relu kernel; shapes baked in as statics."""
    pad = KH // 2

    def kernel(x_ref, w_ref, b_ref, o_ref):
        # x_ref : (H, W*C)        one image, lane index = w*C + c
        # w_ref : (KH, W*C, W*F)  banded weights, one band per vertical tap
        # b_ref : (1, W*F)        bias tiled per output column (lane = w*F + f)
        # o_ref : (H, W*F)        lane-dense output (W*F = 128 here)
        x = x_ref[...]
        acc = None
        for kh in range(KH):                       # static, fully unrolled
            s = kh - pad                           # vertical shift in rows
            if s < 0:
                xs = jnp.concatenate(
                    [jnp.zeros((-s, WC), x.dtype), x[:s, :]], axis=0)
            elif s > 0:
                xs = jnp.concatenate(
                    [x[s:, :], jnp.zeros((s, WC), x.dtype)], axis=0)
            else:
                xs = x
            d = jnp.dot(xs, w_ref[kh], preferred_element_type=jnp.float32)
            acc = d if acc is None else acc + d    # register accumulation
        out = acc + b_ref[...]                     # bias broadcast over H
        o_ref[...] = jnp.maximum(out, 0.0).astype(o_ref.dtype)  # fused ReLU

    return kernel


def _build_banded_weights(weight, W):
    """(F, C, KH, KW) OIHW conv weight -> (KH, W*C, W*F) banded matrices.

    band[kh][w_in*C + c, w*F + f] = weight[f, c, kh, kw] with kw = w_in+pad-w
    when 0 <= kw < KW, else 0.  Out-of-range horizontal taps become zero
    columns, which reproduces SAME zero padding along W with no jnp.pad.
    One-time weight repacking done in plain JAX (layout plumbing, not compute).
    """
    F, C, KH, KW = weight.shape
    pad = KW // 2
    w_hwcf = jnp.transpose(weight, (2, 3, 1, 0))                # (KH, KW, C, F)
    u = jnp.arange(W + 2 * pad)
    wv = jnp.arange(W)
    kwv = jnp.arange(KW)
    onehot = (u[:, None, None] == wv[None, :, None] + kwv[None, None, :])
    onehot = onehot.astype(weight.dtype)                        # (W+2p, W, KW)
    bandp = jnp.einsum('uwk,hkcf->hucwf', onehot, w_hwcf)       # (KH,W+2p,C,W,F)
    bandp = bandp.reshape(KH, (W + 2 * pad) * C, W * F)
    return bandp[:, pad * C: pad * C + W * C, :]                # (KH, W*C, W*F)


def conv2d_relu_pallas(x_nchw, w_oikk, bias):
    """Conv2d(stride=1, pad=SAME) + ReLU via a Pallas TPU kernel.

    x_nchw : (N, C, H, W)  float32   (PyTorch layout at the boundary)
    w_oikk : (F, C, KH, KW) float32  (PyTorch Conv2d weight layout)
    bias   : (F,)           float32
    returns: (N, F, H, W)   float32
    """
    N, C, H, W = x_nchw.shape
    F, _, KH, KW = w_oikk.shape

    # ---- layout plumbing only (no pad, no compute) -------------------------
    # lanes carry w*C + c on input and w*F + f on output.
    x2d = jnp.transpose(x_nchw, (0, 2, 3, 1)).reshape(N, H, W * C)
    w_band = _build_banded_weights(w_oikk, W)                   # (KH, W*C, W*F)
    b_tile = jnp.tile(bias, W).reshape(1, W * F)                # (1, W*F)

    kernel = _make_conv_relu_kernel(H, W * C, KH)

    out2d = pl.pallas_call(
        kernel,
        out_shape=jax.ShapeDtypeStruct((N, H, W * F), x_nchw.dtype),
        grid_spec=pltpu.PrefetchScalarGridSpec(
            num_scalar_prefetch=0,
            grid=(N,),                               # 2 parallel points (v7x)
            in_specs=[
                pl.BlockSpec((None, H, W * C), lambda b: (b, 0, 0)),
                pl.BlockSpec((KH, W * C, W * F), lambda b: (0, 0, 0)),
                pl.BlockSpec((1, W * F), lambda b: (0, 0)),
            ],
            out_specs=pl.BlockSpec((None, H, W * F), lambda b: (b, 0, 0)),
        ),
        compiler_params=pltpu.CompilerParams(
            dimension_semantics=("parallel",)),
    )(x2d, w_band, b_tile)

    # back to NCHW for the PyTorch-style boundary
    return jnp.transpose(out2d.reshape(N, H, W, F), (0, 3, 1, 2))


class ForwardPassMemoryChecker:
    """JAX/Pallas analogue of the PyTorch ForwardPassMemoryChecker wrapper.

    forward(): runs the wrapped callable (the Pallas conv+relu here) and
    records per-"module" activation-memory estimates, mirroring the hook-based
    accounting of the original (which measured CUDA allocator deltas around
    each submodule call).
    """

    def __init__(self, module_fn, module_names):
        self.module = module_fn
        self.module_names = list(module_names)
        self.module_costs = []        # per-forward list of (name, bytes)
        self.meters = {}              # name -> list of observed costs
        self.log = []                 # stands in for logging.info(total_mem)

    @staticmethod
    def _tensor_bytes(t):
        # Original hard-codes 4 bytes/element; use the real itemsize so a
        # bf16/int8 inner module is accounted correctly.
        return int(t.size) * t.dtype.itemsize

    def forward(self, *args, **kwargs):
        self.module_costs.clear()
        tracked = [a for a in args if isinstance(a, jnp.ndarray)]
        pre_total = sum(self._tensor_bytes(a) for a in tracked)
        self.log.append(("pre_forward_tracked_bytes", pre_total))

        result = self.module(*args, **kwargs)

        # TODO(synk): torch.cuda.memory_allocated() / gc.get_objects() walking
        # has no TPU/JAX equivalent; approximate each submodule's cost as its
        # output activation bytes.
        self.module_costs.append(
            (self.module_names[0], self._tensor_bytes(result)))
        self.log.append(("post_forward_tracked_bytes",
                         pre_total + self._tensor_bytes(result)))

        for name, c in self.module_costs:
            self.meters.setdefault(name, []).append(c)
        return result

    __call__ = forward

    def get_time_info(self):
        meters = {k: {"mean": float(sum(v) / len(v)), "n": len(v)}
                  for k, v in self.meters.items()}
        # TODO(synk): try_get_cpu_info / nvidia-smi probes are host/GPU
        # specific; omitted on TPU.
        return {"meters": meters, "cpu_info": None, "gpu_info": None}


if __name__ == "__main__":
    key = jax.random.PRNGKey(0)
    kx, kw, kb = jax.random.split(key, 3)

    # small shapes consistent with a conv forward: NCHW input
    N, C, H, W = 2, 4, 16, 16
    F, KH, KW = 8, 3, 3

    x = jax.random.normal(kx, (N, C, H, W), dtype=jnp.float32)
    weight = jax.random.normal(kw, (F, C, KH, KW), dtype=jnp.float32) * 0.1
    bias = jax.random.normal(kb, (F,), dtype=jnp.float32) * 0.1

    inner = jax.jit(lambda inp: conv2d_relu_pallas(inp, weight, bias))
    checker = ForwardPassMemoryChecker(inner, module_names=["conv_relu"])

    out = checker(x)
    out = jax.block_until_ready(out)

    # correctness check against a pure-JAX reference of the inner module
    ref = jax.lax.conv_general_dilated(
        x, weight, window_strides=(1, 1), padding="SAME",
        dimension_numbers=("NCHW", "OIHW", "NCHW"))
    ref = jnp.maximum(ref + bias.reshape(1, F, 1, 1), 0.0)
    assert out.shape == (N, F, H, W)
    assert jnp.allclose(out, ref, atol=1e-4, rtol=1e-4)
    _ = checker.get_time_info()

    print("KERNEL_OK")
</pallas_src>

<mosaic_0001>
module attributes {stable_mosaic.version = 11 : i64} {
  func.func @kernel(%arg0: i32, %arg1: memref<1x16x64xf32, #tpu.memory_space<vmem>>, %arg2: memref<3x64x128xf32, #tpu.memory_space<vmem>>, %arg3: memref<1x128xf32, #tpu.memory_space<vmem>>, %arg4: memref<1x16x128xf32, #tpu.memory_space<vmem>>) attributes {dimension_semantics = [#tpu.dimension_semantics<parallel>], iteration_bounds = array<i64: 2>, scalar_prefetch = 0 : i64, scratch_operands = 0 : i64, tpu.core_type = #tpu.core_type<tc>, window_params = [{transform_indices = @transform_0, window_bounds = array<i64: 1, 16, 64>}, {pipeline_mode = #tpu.pipeline_mode<synchronous>, transform_indices = @transform_1, window_bounds = array<i64: 3, 64, 128>}, {pipeline_mode = #tpu.pipeline_mode<synchronous>, transform_indices = @transform_2, window_bounds = array<i64: 1, 128>}, {transform_indices = @transform_3, window_bounds = array<i64: 1, 16, 128>}]} {
    %c0 = arith.constant 0 : index
    %c0_0 = arith.constant 0 : index
    %c0_1 = arith.constant 0 : index
    %0 = vector.load %arg1[%c0, %c0_0, %c0_1] : memref<1x16x64xf32, #tpu.memory_space<vmem>>, vector<1x16x64xf32>
    %1 = vector.shape_cast %0 : vector<1x16x64xf32> to vector<16x64xf32>
    %cst = arith.constant 0.000000e+00 : f32
    %2 = vector.broadcast %cst : f32 to vector<1x64xf32>
    %3 = vector.extract_strided_slice %1 {offsets = [0, 0], sizes = [15, 64], strides = [1, 1]} : vector<16x64xf32> to vector<15x64xf32>
    %4 = tpu.concatenate %2, %3 in 0 : vector<1x64xf32>, vector<15x64xf32> -> vector<16x64xf32>
    %c0_2 = arith.constant 0 : index
    %c0_3 = arith.constant 0 : index
    %c0_4 = arith.constant 0 : index
    %5 = vector.load %arg2[%c0_2, %c0_3, %c0_4] : memref<3x64x128xf32, #tpu.memory_space<vmem>>, vector<1x64x128xf32>
    %6 = vector.shape_cast %5 : vector<1x64x128xf32> to vector<64x128xf32>
    %cst_5 = arith.constant dense<0.000000e+00> : vector<16x128xf32>
    %7 = tpu.matmul %4, %6, %cst_5 {dimension_numbers = #tpu.dot_dimension_numbers<[1], [0], [0], [1], [0, 0, 1, 1], [], []>} : vector<16x64xf32>, vector<64x128xf32>, vector<16x128xf32> -> vector<16x128xf32>
    %c1 = arith.constant 1 : index
    %c0_6 = arith.constant 0 : index
    %c0_7 = arith.constant 0 : index
    %8 = vector.load %arg2[%c1, %c0_6, %c0_7] : memref<3x64x128xf32, #tpu.memory_space<vmem>>, vector<1x64x128xf32>
    %9 = vector.shape_cast %8 : vector<1x64x128xf32> to vector<64x128xf32>
    %cst_8 = arith.constant dense<0.000000e+00> : vector<16x128xf32>
    %10 = tpu.matmul %1, %9, %cst_8 {dimension_numbers = #tpu.dot_dimension_numbers<[1], [0], [0], [1], [0, 0, 1, 1], [], []>} : vector<16x64xf32>, vector<64x128xf32>, vector<16x128xf32> -> vector<16x128xf32>
    %11 = arith.addf %7, %10 : vector<16x128xf32>
    %12 = vector.extract_strided_slice %1 {offsets = [1, 0], sizes = [15, 64], strides = [1, 1]} : vector<16x64xf32> to vector<15x64xf32>
    %cst_9 = arith.constant 0.000000e+00 : f32
    %13 = vector.broadcast %cst_9 : f32 to vector<1x64xf32>
    %14 = tpu.concatenate %12, %13 in 0 : vector<15x64xf32>, vector<1x64xf32> -> vector<16x64xf32>
    %c2 = arith.constant 2 : index
    %c0_10 = arith.constant 0 : index
    %c0_11 = arith.constant 0 : index
    %15 = vector.load %arg2[%c2, %c0_10, %c0_11] : memref<3x64x128xf32, #tpu.memory_space<vmem>>, vector<1x64x128xf32>
    %16 = vector.shape_cast %15 : vector<1x64x128xf32> to vector<64x128xf32>
    %cst_12 = arith.constant dense<0.000000e+00> : vector<16x128xf32>
    %17 = tpu.matmul %14, %16, %cst_12 {dimension_numbers = #tpu.dot_dimension_numbers<[1], [0], [0], [1], [0, 0, 1, 1], [], []>} : vector<16x64xf32>, vector<64x128xf32>, vector<16x128xf32> -> vector<16x128xf32>
    %18 = arith.addf %11, %17 : vector<16x128xf32>
    %c0_13 = arith.constant 0 : index
    %c0_14 = arith.constant 0 : index
    %19 = vector.load %arg3[%c0_13, %c0_14] : memref<1x128xf32, #tpu.memory_space<vmem>>, vector<1x128xf32>
    %20 = vector.broadcast %19 : vector<1x128xf32> to vector<16x128xf32>
    %21 = arith.addf %18, %20 : vector<16x128xf32>
    %cst_15 = arith.constant 0.000000e+00 : f32
    %22 = vector.broadcast %cst_15 : f32 to vector<16x128xf32>
    %23 = arith.maximumf %21, %22 : vector<16x128xf32>
    %c0_16 = arith.constant 0 : index
    %c0_17 = arith.constant 0 : index
    %c0_18 = arith.constant 0 : index
    %24 = vector.load %arg4[%c0_16, %c0_17, %c0_18] : memref<1x16x128xf32, #tpu.memory_space<vmem>>, vector<1x16x128xf32>
    %25 = vector.shape_cast %24 : vector<1x16x128xf32> to vector<16x128xf32>
    %26 = vector.shape_cast %23 : vector<16x128xf32> to vector<1x16x128xf32>
    tpu.vector_store %arg4[%c0_16, %c0_17, %c0_18], %26 {strides = array<i32>} : memref<1x16x128xf32, #tpu.memory_space<vmem>>, vector<1x16x128xf32>,
    return
  }
  func.func @transform_0(%arg0: i32) -> (i32, i32, i32) {
    %c0_i32 = arith.constant 0 : i32
    %c0_i32_0 = arith.constant 0 : i32
    %c0_i32_1 = arith.constant 0 : i32
    return %arg0, %c0_i32, %c0_i32_0 : i32, i32, i32
  }
  func.func @transform_1(%arg0: i32) -> (i32, i32, i32) {
    %c0_i32 = arith.constant 0 : i32
    %c0_i32_0 = arith.constant 0 : i32
    %c0_i32_1 = arith.constant 0 : i32
    %c0_i32_2 = arith.constant 0 : i32
    return %c0_i32, %c0_i32_0, %c0_i32_1 : i32, i32, i32
  }
  func.func @transform_2(%arg0: i32) -> (i32, i32) {
    %c0_i32 = arith.constant 0 : i32
    %c0_i32_0 = arith.constant 0 : i32
    %c0_i32_1 = arith.constant 0 : i32
    return %c0_i32, %c0_i32_0 : i32, i32
  }
  func.func @transform_3(%arg0: i32) -> (i32, i32, i32) {
    %c0_i32 = arith.constant 0 : i32
    %c0_i32_0 = arith.constant 0 : i32
    %c0_i32_1 = arith.constant 0 : i32
    return %arg0, %c0_i32, %c0_i32_0 : i32, i32, i32
  }
}

</mosaic_0001>

<llo_original>
// kernel: tile.6
$region0: #{tile.6}
  #allocation0 [shape = 's32[1]{0}', space=sflag, size = 0x4, scoped, tag = 'scoped memory for tile.6']
  %s0 = inlined_call_operand.vmem [shape: f32[8], index: 0, kind: input, shape index: {}]
  %s1 = inlined_call_operand.vmem [shape: f32[16,8], index: 1, kind: output, shape index: {}]
  // Predicated region
  $region2: #{tile.6} parent=0 // pred_check
    _
  $region3: #{tile.6} parent=0 // pred_check_branch
    %3 = sbr.rel (0) target = $region5
  $region4: #{tile.6} parent=0 // pred_region
    _
  $region5: #{tile.6} parent=0 // pred_fallthru
    _
  %v4 = vld [vmem:[%s0] ss:$0 sm:$0xff]
  %5 = vst [vmem:[%s1] sm:$0xff] %v4
  %s6 = scalar_lea.vmem %s1, 8
  %7 = vst [vmem:[%s6] sm:$0xff] %v4

// kernel: tile.7
$region0: #{tile.7}
  %s0 = inlined_call_operand.vmem [shape: f32[16,8], index: 0, kind: input, shape index: {}]
  %s1 = inlined_call_operand.vmem [shape: f32[1,128], index: 1, kind: output, shape index: {}]
  $region1: #{tile.7} parent=0
    #allocation0 [shape = 'u8[4096]{0}', space=vmem, size = 0x1000, scoped, tag = 'scoped mem for output reshape']
    %v2 = vld [vmem:[%s0] sm:$0x1]
    %vm3 = vcmask 64512
    %4 = vst.msk [vmem:[#allocation0] sm:$0x1] %vm3, %v2
    %s5 = scalar_lea.vmem %s0, 15
    %v6 = vld [vmem:[%s5] sm:$0x1]
    %7 = vrot.lane.b32.xlu0 %v6, 120
    %v8 = vpop.permute.xlu0 %7
    %vm9 = vcmask 1048512
    %10 = vst.msk [vmem:[#allocation0] sm:$0x1] %vm9, %v8
    %s11 = scalar_lea.vmem %s0, 14
    %v12 = vld [vmem:[%s11] sm:$0x1]
    %13 = vrot.lane.b32.xlu0 %v12, 112
    %v14 = vpop.permute.xlu0 %13
    %vm15 = vcmask 982912
    %16 = vst.msk [vmem:[#allocation0] sm:$0x1] %vm15, %v14
    %s17 = scalar_lea.vmem %s0, 13
    %v18 = vld [vmem:[%s17] sm:$0x1]
    %19 = vrot.lane.b32.xlu0 %v18, 104
    %v20 = vpop.permute.xlu0 %19
    %vm21 = vcmask 917312
    %22 = vst.msk [vmem:[#allocation0] sm:$0x1] %vm21, %v20
    %s23 = scalar_lea.vmem %s0, 12
    %v24 = vld [vmem:[%s23] sm:$0x1]
    %25 = vrot.lane.b32.xlu0 %v24, 96
    %v26 = vpop.permute.xlu0 %25
    %vm27 = vcmask 851712
    %28 = vst.msk [vmem:[#allocation0] sm:$0x1] %vm27, %v26
    %s29 = scalar_lea.vmem %s0, 11
    %v30 = vld [vmem:[%s29] sm:$0x1]
    %31 = vrot.lane.b32.xlu0 %v30, 88
    %v32 = vpop.permute.xlu0 %31
    %vm33 = vcmask 786112
    %34 = vst.msk [vmem:[#allocation0] sm:$0x1] %vm33, %v32
    %s35 = scalar_lea.vmem %s0, 10
    %v36 = vld [vmem:[%s35] sm:$0x1]
    %37 = vrot.lane.b32.xlu0 %v36, 80
    %v38 = vpop.permute.xlu0 %37
    %vm39 = vcmask 720512
    %40 = vst.msk [vmem:[#allocation0] sm:$0x1] %vm39, %v38
    %s41 = scalar_lea.vmem %s0, 9
    %v42 = vld [vmem:[%s41] sm:$0x1]
    %43 = vrot.lane.b32.xlu0 %v42, 72
    %v44 = vpop.permute.xlu0 %43
    %vm45 = vcmask 654912
    %46 = vst.msk [vmem:[#allocation0] sm:$0x1] %vm45, %v44
    %s47 = scalar_lea.vmem %s0, 8
    %v48 = vld [vmem:[%s47] sm:$0x1]
    %49 = vrot.lane.b32.xlu0 %v48, 64
    %v50 = vpop.permute.xlu0 %49
    %vm51 = vcmask 589312
    %52 = vst.msk [vmem:[#allocation0] sm:$0x1] %vm51, %v50
    %s53 = scalar_lea.vmem %s0, 7
    %v54 = vld [vmem:[%s53] sm:$0x1]
    %55 = vrot.lane.b32.xlu0 %v54, 56
    %v56 = vpop.permute.xlu0 %55
    %vm57 = vcmask 523712
    %58 = vst.msk [vmem:[#allocation0] sm:$0x1] %vm57, %v56
    %s59 = scalar_lea.vmem %s0, 6
    %v60 = vld [vmem:[%s59] sm:$0x1]
    %61 = vrot.lane.b32.xlu0 %v60, 48
    %v62 = vpop.permute.xlu0 %61
    %vm63 = vcmask 458112
    %64 = vst.msk [vmem:[#allocation0] sm:$0x1] %vm63, %v62
    %s65 = scalar_lea.vmem %s0, 5
    %v66 = vld [vmem:[%s65] sm:$0x1]
    %67 = vrot.lane.b32.xlu0 %v66, 40
    %v68 = vpop.permute.xlu0 %67
    %vm69 = vcmask 392512
    %70 = vst.msk [vmem:[#allocation0] sm:$0x1] %vm69, %v68
    %s71 = scalar_lea.vmem %s0, 4
    %v72 = vld [vmem:[%s71] sm:$0x1]
    %73 = vrot.lane.b32.xlu0 %v72, 32
    %v74 = vpop.permute.xlu0 %73
    %vm75 = vcmask 326912
    %76 = vst.msk [vmem:[#allocation0] sm:$0x1] %vm75, %v74
    %s77 = scalar_lea.vmem %s0, 3
    %v78 = vld [vmem:[%s77] sm:$0x1]
    %79 = vrot.lane.b32.xlu0 %v78, 24
    %v80 = vpop.permute.xlu0 %79
    %vm81 = vcmask 261312
    %82 = vst.msk [vmem:[#allocation0] sm:$0x1] %vm81, %v80
    %s83 = scalar_lea.vmem %s0, 2
    %v84 = vld [vmem:[%s83] sm:$0x1]
    %85 = vrot.lane.b32.xlu0 %v84, 16
    %v86 = vpop.permute.xlu0 %85
    %vm87 = vcmask 195712
    %88 = vst.msk [vmem:[#allocation0] sm:$0x1] %vm87, %v86
    %s89 = scalar_lea.vmem %s0, 1
    %v90 = vld [vmem:[%s89] sm:$0x1]
    %91 = vrot.lane.b32.xlu0 %v90, 8
    %v92 = vpop.permute.xlu0 %91
    %vm93 = vcmask 130112
    %94 = vst.msk [vmem:[#allocation0] sm:$0x1] %vm93, %v92
    %s96 = sshll.u32 1, 1
    %s97 = ssub.s32 %s96, 1
    %v99 = vld [vmem:[#allocation0] sm:%s97]
    %s100 = sshll.u32 1, 1
    %s101 = ssub.s32 %s100, 1
    %102 = vst [vmem:[%s1] sm:%s101] %v99

// kernel: _lambda_.1
$region0: #{_lambda_.1}
  #allocation0 [shape = 'u32[]', space=smem, size = 0x4, offset = 0x4, fixed_abs, tag = 'smem constant byte address 0x4 - core index']
  #allocation1 [shape = 'u32[144,128]{1,0:T(1,128)}', space=vmem, size = 0x12000, scoped, tag = 'internal scratch']
  %s0 = inlined_call_operand.vmem [shape: f32[2,16,64], index: 0, kind: input, shape index: {}]
  %s1 = inlined_call_operand.vmem [shape: f32[3,64,128], index: 1, kind: input, shape index: {}]
  %s2 = inlined_call_operand.vmem [shape: f32[1,128], index: 2, kind: input, shape index: {}]
  %s3 = inlined_call_operand.vmem [shape: f32[2,16,128], index: 3, kind: output, shape index: {}]
  %s4 = sld [smem:[#allocation0]]
  $region45: #{_lambda_.1} parent=0
    _
  %s6 = ssub.s32 1, %s4
  %s7 = scalar_select 0, %s6, %s4
  loop: start=0, step=1, limit=4
  $region2: #{_lambda_.1} parent=0 // loop_pre_header
    _
  $region3: #{_lambda_.1} parent=0 // loop_header
    %s9 = sphi 0, %s13
    %p10 = scmp.ge.s32.totalorder %s9, 4
    %s19 = sphi 0, %s21
    %s22 = sphi 0, %s19
    %s23 = sphi 0, %s22
    %s39 = sphi 0, %s23
    %s43 = sphi 0, %s43
    %s45 = sphi 0, %s43
    %s46 = sphi 0, %s45
    %s60 = sphi 0, %s46
    %s64 = sphi 0, %s64
    %s66 = sphi 0, %s64
    %s67 = sphi 0, %s66
    %s81 = sphi 0, %s67
    %s87 = sphi 0, %s89
    %s90 = sphi 0, %s87
    %s91 = sphi 0, %s90
    %s107 = sphi 0, %s91
  $region4: #{_lambda_.1} parent=0 // loop_header_branch
    %12 = sbr.rel (%p10) target = $region8
  $region5: #{_lambda_.1} parent=0 // loop_body
    %s14 = ssub.s32 %s9, 1
    %s15 = ssub.s32 %s9, 2
    %s16 = sadd.s32 %s9, 1
    %s17 = ssub.s32 %s9, %s16
    %p18 = scmp.eq.s32.totalorder %s17, 0
    %s20 = sadd.s32 %s19, 1
    %s21 = scalar_select %p18, %s19, %s20
    %p24 = pneg %p18
    %p25 = scmp.eq.s32.totalorder %s9, 1
    %p26 = por %p24, %p25
    %p27 = scmp.ne.s32.totalorder %s19, %s22
    %p28 = scmp.eq.s32.totalorder %s9, 0
    %p29 = por %p27, %p28
    %p30 = scmp.ne.s32.totalorder %s19, %s22
    %p31 = scmp.eq.s32.totalorder %s14, 1
    %p32 = por %p30, %p31
    %p33 = scmp.ne.s32.totalorder %s22, %s23
    %p34 = scmp.eq.s32.totalorder %s14, 0
    %p35 = por %p33, %p34
    %p36 = scmp.ne.s32.totalorder %s22, %s23
    %p37 = scmp.eq.s32.totalorder %s15, 1
    %p38 = por %p36, %p37
    %p40 = scmp.ne.s32.totalorder %s23, %s39
    %p41 = scmp.eq.s32.totalorder %s15, 0
    %p42 = por %p40, %p41
    %s44 = sadd.s32 %s43, 1
    %p47 = scmp.eq.s32.totalorder %s9, 1
    %p48 = scmp.ne.s32.totalorder %s43, %s45
    %p49 = scmp.eq.s32.totalorder %s9, 0
    %p50 = por %p48, %p49
    %p51 = scmp.ne.s32.totalorder %s43, %s45
    %p52 = scmp.eq.s32.totalorder %s14, 1
    %p53 = por %p51, %p52
    %p54 = scmp.ne.s32.totalorder %s45, %s46
    %p55 = scmp.eq.s32.totalorder %s14, 0
    %p56 = por %p54, %p55
    %p57 = scmp.ne.s32.totalorder %s45, %s46
    %p58 = scmp.eq.s32.totalorder %s15, 1
    %p59 = por %p57, %p58
    %p61 = scmp.ne.s32.totalorder %s46, %s60
    %p62 = scmp.eq.s32.totalorder %s15, 0
    %p63 = por %p61, %p62
    %s65 = sadd.s32 %s64, 1
    %p68 = scmp.eq.s32.totalorder %s9, 1
    %p69 = scmp.ne.s32.totalorder %s64, %s66
    %p70 = scmp.eq.s32.totalorder %s9, 0
    %p71 = por %p69, %p70
    %p72 = scmp.ne.s32.totalorder %s64, %s66
    %p73 = scmp.eq.s32.totalorder %s14, 1
    %p74 = por %p72, %p73
    %p75 = scmp.ne.s32.totalorder %s66, %s67
    %p76 = scmp.eq.s32.totalorder %s14, 0
    %p77 = por %p75, %p76
    %p78 = scmp.ne.s32.totalorder %s66, %s67
    %p79 = scmp.eq.s32.totalorder %s15, 1
    %p80 = por %p78, %p79
    %p82 = scmp.ne.s32.totalorder %s67, %s81
    %p83 = scmp.eq.s32.totalorder %s15, 0
    %p84 = por %p82, %p83
    %s85 = ssub.s32 %s9, %s16
    %p86 = scmp.eq.s32.totalorder %s85, 0
    %s88 = sadd.s32 %s87, 1
    %s89 = scalar_select %p86, %s87, %s88
    %p92 = pneg %p86
    %p93 = scmp.eq.s32.totalorder %s9, 1
    %p94 = por %p92, %p93
    %p95 = scmp.ne.s32.totalorder %s87, %s90
    %p96 = scmp.eq.s32.totalorder %s9, 0
    %p97 = por %p95, %p96
    %p98 = scmp.ne.s32.totalorder %s87, %s90
    %p99 = scmp.eq.s32.totalorder %s14, 1
    %p100 = por %p98, %p99
    %p101 = scmp.ne.s32.totalorder %s90, %s91
    %p102 = scmp.eq.s32.totalorder %s14, 0
    %p103 = por %p101, %p102
    %p104 = scmp.ne.s32.totalorder %s90, %s91
    %p105 = scmp.eq.s32.totalorder %s15, 1
    %p106 = por %p104, %p105
    %p108 = scmp.ne.s32.totalorder %s91, %s107
    %p109 = scmp.eq.s32.totalorder %s15, 0
    %p110 = por %p108, %p109
    %p111 = scmp.le.s32.totalorder 1, %s9
    %p112 = scmp.lt.s32.totalorder %s9, 3
    %p113 = pnand %p111, %p112
    %p114 = pneg %p113
    // Predicated region
    $region9: #{_lambda_.1} parent=5 // pred_check
      _
    $region10: #{_lambda_.1} parent=5 // pred_check_branch
      %116 = sbr.rel (%p113) target = $region12
    $region11: #{_lambda_.1} parent=5 // pred_region
      %s117 = ssub.s32 %s9, 1
      // Predicated region
      $region13: #{_lambda_.1} parent=11 // pred_check
        %p118 = pneg %p56
      $region14: #{_lambda_.1} parent=11 // pred_check_branch
        %120 = sbr.rel (%p118) target = $region16
      $region15: #{_lambda_.1} parent=11 // pred_region
        _
      $region16: #{_lambda_.1} parent=11 // pred_fallthru
        _
      // Predicated region
      $region17: #{_lambda_.1} parent=11 // pred_check
        %p121 = pneg %p77
      $region18: #{_lambda_.1} parent=11 // pred_check_branch
        %123 = sbr.rel (%p121) target = $region20
      $region19: #{_lambda_.1} parent=11 // pred_region
        _
      $region20: #{_lambda_.1} parent=11 // pred_fallthru
        _
    $region12: #{_lambda_.1} parent=5 // pred_fallthru
      _
    %p124 = scmp.lt.s32.totalorder %s9, 2
    // Predicated region
    $region21: #{_lambda_.1} parent=5 // pred_check
      %p125 = pneg %p124
    $region22: #{_lambda_.1} parent=5 // pred_check_branch
      %127 = sbr.rel (%p125) target = $region24
    $region23: #{_lambda_.1} parent=5 // pred_region
      // Predicated region
      $region25: #{_lambda_.1} parent=23 // pred_check
        %p128 = pneg %p29
      $region26: #{_lambda_.1} parent=23 // pred_check_branch
        %130 = sbr.rel (%p128) target = $region28
      $region27: #{_lambda_.1} parent=23 // pred_region
        %p131 = scmp.lt.s32.totalorder %s9, 1
        %s132 = scalar_select %p131, %s9, 1
        %s133 = smul.addr %s132, 2
        %s134 = smul.addr %s133, 8
        %s135 = scalar_lea.vmem %s0, %s134
      $region28: #{_lambda_.1} parent=23 // pred_fallthru
        _
    $region24: #{_lambda_.1} parent=5 // pred_fallthru
      _
    %p136 = scmp.le.s32.totalorder 1, %s9
    %p137 = scmp.lt.s32.totalorder %s9, 3
    %p138 = pnand %p136, %p137
    %p139 = pneg %p138
    // Predicated region
    $region29: #{_lambda_.1} parent=5 // pred_check
      _
    $region30: #{_lambda_.1} parent=5 // pred_check_branch
      %141 = sbr.rel (%p138) target = $region32
    $region31: #{_lambda_.1} parent=5 // pred_region
      %s142 = ssub.s32 %s9, 1
      %p143 = scmp.lt.s32.totalorder %s14, 1
      %s144 = scalar_select %p143, %s14, 1
      %s145 = smul.addr %s144, 2
      %s146 = smul.addr %s145, 8
      %s147 = scalar_lea.vmem %s0, %s146
      %p148 = pneg %p35
      %p149 = pneg %p32
      %p150 = pneg %p56
      %p151 = pneg %p53
      %p152 = pneg %p77
      %p153 = pneg %p74
      %p154 = pneg %p103
      %p155 = pneg %p100
      %p156 = scmp.lt.s32.totalorder %s14, 1
      %s157 = scalar_select %p156, %s14, 1
      %s158 = smul.addr %s157, 2
      %s159 = smul.addr %s158, 8
      %s160 = scalar_lea.vmem %s3, %s159
      %p161 = scmp.lt.s32.totalorder %s14, 1
      %s162 = scalar_select %p161, %s14, 1
      %s163 = smul.addr %s162, 2
      %s164 = smul.addr %s163, 8
      %s165 = scalar_lea.vmem %s0, %s164
      %p166 = scmp.lt.s32.totalorder %s14, 1
      %s167 = scalar_select %p166, %s14, 1
      %s168 = smul.addr %s167, 2
      %s169 = smul.addr %s168, 8
      %s170 = scalar_lea.vmem %s3, %s169
      %v171 = vld [vmem:[%s165] sm:$0xff]
      %v172 = vld [vmem:[%s165 + $0x8] sm:$0xff]
      %vm175 = vcmask 1040384
      %v176 = vrot.slane %v171, 7
      %v177 = vrot.slane %v172, 7
      %v178 = vsel %vm175, %v176, %v177
      %v180 = vsel %vm175, 0.0, %v176
      %v181 = vld [vmem:[%s1] sm:$0xff]
      %v182 = vld [vmem:[%s1 + $0x8] sm:$0xff]
      %v183 = vld [vmem:[%s1 + $0x10] sm:$0xff]
      %v184 = vld [vmem:[%s1 + $0x18] sm:$0xff]
      %v185 = vld [vmem:[%s1 + $0x20] sm:$0xff]
      %v186 = vld [vmem:[%s1 + $0x28] sm:$0xff]
      %v187 = vld [vmem:[%s1 + $0x30] sm:$0xff]
      %v188 = vld [vmem:[%s1 + $0x38] sm:$0xff]
      %s189 = scalar_lea.vmem %s1, 64
      %v190 = vld [vmem:[%s189] sm:$0xff]
      %v191 = vld [vmem:[%s189 + $0x8] sm:$0xff]
      %v192 = vld [vmem:[%s189 + $0x10] sm:$0xff]
      %v193 = vld [vmem:[%s189 + $0x18] sm:$0xff]
      %v194 = vld [vmem:[%s189 + $0x20] sm:$0xff]
      %v195 = vld [vmem:[%s189 + $0x28] sm:$0xff]
      %v196 = vld [vmem:[%s189 + $0x30] sm:$0xff]
      %v197 = vld [vmem:[%s189 + $0x38] sm:$0xff]
      %vm198 = vcmask 523264
      %v199 = vsel %vm198, %v171, 0
      %v201 = vsel %vm198, %v172, 0
      %203 = vmatprep.subr.mxu0 0.0
      %204 = vmatpush1.msra.mxu0 0.0
      %205 = vmatprep.subr.mxu0 0.0
      %206 = vmatpush1.msra.mxu0 0.0
      %207 = vmatprep.subr.mxu0 0.0
      %208 = vmatpush1.msra.mxu0 0.0
      %209 = vmatprep.subr.mxu0 0.0
      %210 = vmatpush1.msra.mxu0 0.0
      %211 = vmatprep.subr.mxu0 0.0
      %212 = vmatpush1.msra.mxu0 0.0
      %213 = vmatprep.subr.mxu0 0.0
      %214 = vmatpush1.msra.mxu0 0.0
      %215 = vmatprep.subr.mxu0 0.0
      %216 = vmatpush1.msra.mxu0 0.0
      %217 = vmatprep.subr.mxu0 0.0
      %218 = vmatpush1.msra.mxu0 0.0
      %219 = vmatprep.subr.mxu0 0.0
      %220 = vmatpush1.msra.mxu0 %v197
      %221 = vmatprep.subr.mxu0 0.0
      %222 = vmatpush1.msra.mxu0 %v196
      %223 = vmatprep.subr.mxu0 0.0
      %224 = vmatpush1.msra.mxu0 %v195
      %225 = vmatprep.subr.mxu0 0.0
      %226 = vmatpush1.msra.mxu0 %v194
      %227 = vmatprep.subr.mxu0 0.0
      %228 = vmatpush1.msra.mxu0 %v193
      %229 = vmatprep.subr.mxu0 0.0
      %230 = vmatpush1.msra.mxu0 %v192
      %231 = vmatprep.subr.mxu0 0.0
      %232 = vmatpush1.msra.mxu0 %v191
      %233 = vmatprep.subr.mxu0 0.0
      %234 = vmatpush1.msra.mxu0 %v190
      %235 = vmatprep.subr.mxu0 0.0
      %236 = vmatpush2.msra.mxu0 0.0
      %237 = vmatprep.subr.mxu0 0.0
      %238 = vmatpush2.msra.mxu0 0.0
      %239 = vmatprep.subr.mxu0 0.0
      %240 = vmatpush2.msra.mxu0 0.0
      %241 = vmatprep.subr.mxu0 0.0
      %242 = vmatpush2.msra.mxu0 0.0
      %243 = vmatprep.subr.mxu0 0.0
      %244 = vmatpush2.msra.mxu0 0.0
      %245 = vmatprep.subr.mxu0 0.0
      %246 = vmatpush2.msra.mxu0 0.0
      %247 = vmatprep.subr.mxu0 0.0
      %248 = vmatpush2.msra.mxu0 0.0
      %249 = vmatprep.subr.mxu0 0.0
      %250 = vmatpush2.msra.mxu0 0.0
      %251 = vmatprep.subr.mxu0 0.0
      %252 = vmatpush2.msra.mxu0 0.0
      %253 = vmatprep.subr.mxu0 0.0
      %254 = vmatpush2.msra.mxu0 0.0
      %255 = vmatprep.subr.mxu0 0.0
      %256 = vmatpush2.msra.mxu0 0.0
      %257 = vmatprep.subr.mxu0 0.0
      %258 = vmatpush2.msra.mxu0 0.0
      %259 = vmatprep.subr.mxu0 0.0
      %260 = vmatpush2.msra.mxu0 0.0
      %261 = vmatprep.subr.mxu0 0.0
      %262 = vmatpush2.msra.mxu0 0.0
      %263 = vmatprep.subr.mxu0 0.0
      %264 = vmatpush2.msra.mxu0 0.0
      %265 = vmatprep.subr.mxu0 0.0
      %266 = vmatpush2.msra.mxu0 0.0
      %267 = vmatprep.mubr.f32.mxu0 0.0
      %268 = vmatmul.mubr.f32.gmra.mxu0 %v199
      %v269 = vpop.f32.mrf.mxu0
      %v270 = vadd.f32 0.0, %v269
      %v271 = vpop.f32.mrf.mxu0
      %272 = vmatprep.mubr.f32.mxu0 0.0
      %273 = vmatmul.mubr.f32.gmra.mxu0 %v201
      %v274 = vpop.f32.mrf.mxu0
      %v275 = vadd.f32 0.0, %v274
      %v276 = vpop.f32.mrf.mxu0
      %277 = vdwg.mxu0
      %v279 = vsel %vm198, %v180, 0
      %v281 = vsel %vm198, %v178, 0
      %283 = vmatprep.subr.mxu0 0.0
      %284 = vmatpush1.msra.mxu0 0.0
      %285 = vmatprep.subr.mxu0 0.0
      %286 = vmatpush1.msra.mxu0 0.0
      %287 = vmatprep.subr.mxu0 0.0
      %288 = vmatpush1.msra.mxu0 0.0
      %289 = vmatprep.subr.mxu0 0.0
      %290 = vmatpush1.msra.mxu0 0.0
      %291 = vmatprep.subr.mxu0 0.0
      %292 = vmatpush1.msra.mxu0 0.0
      %293 = vmatprep.subr.mxu0 0.0
      %294 = vmatpush1.msra.mxu0 0.0
      %295 = vmatprep.subr.mxu0 0.0
      %296 = vmatpush1.msra.mxu0 0.0
      %297 = vmatprep.subr.mxu0 0.0
      %298 = vmatpush1.msra.mxu0 0.0
      %299 = vmatprep.subr.mxu0 0.0
      %300 = vmatpush1.msra.mxu0 %v188
      %301 = vmatprep.subr.mxu0 0.0
      %302 = vmatpush1.msra.mxu0 %v187
      %303 = vmatprep.subr.mxu0 0.0
      %304 = vmatpush1.msra.mxu0 %v186
      %305 = vmatprep.subr.mxu0 0.0
      %306 = vmatpush1.msra.mxu0 %v185
      %307 = vmatprep.subr.mxu0 0.0
      %308 = vmatpush1.msra.mxu0 %v184
      %309 = vmatprep.subr.mxu0 0.0
      %310 = vmatpush1.msra.mxu0 %v183
      %311 = vmatprep.subr.mxu0 0.0
      %312 = vmatpush1.msra.mxu0 %v182
      %313 = vmatprep.subr.mxu0 0.0
      %314 = vmatpush1.msra.mxu0 %v181
      %315 = vmatprep.subr.mxu0 0.0
      %316 = vmatpush2.msra.mxu0 0.0
      %317 = vmatprep.subr.mxu0 0.0
      %318 = vmatpush2.msra.mxu0 0.0
      %319 = vmatprep.subr.mxu0 0.0
      %320 = vmatpush2.msra.mxu0 0.0
      %321 = vmatprep.subr.mxu0 0.0
      %322 = vmatpush2.msra.mxu0 0.0
      %323 = vmatprep.subr.mxu0 0.0
      %324 = vmatpush2.msra.mxu0 0.0
      %325 = vmatprep.subr.mxu0 0.0
      %326 = vmatpush2.msra.mxu0 0.0
      %327 = vmatprep.subr.mxu0 0.0
      %328 = vmatpush2.msra.mxu0 0.0
      %329 = vmatprep.subr.mxu0 0.0
      %330 = vmatpush2.msra.mxu0 0.0
      %331 = vmatprep.subr.mxu0 0.0
      %332 = vmatpush2.msra.mxu0 0.0
      %333 = vmatprep.subr.mxu0 0.0
      %334 = vmatpush2.msra.mxu0 0.0
      %335 = vmatprep.subr.mxu0 0.0
      %336 = vmatpush2.msra.mxu0 0.0
      %337 = vmatprep.subr.mxu0 0.0
      %338 = vmatpush2.msra.mxu0 0.0
      %339 = vmatprep.subr.mxu0 0.0
      %340 = vmatpush2.msra.mxu0 0.0
      %341 = vmatprep.subr.mxu0 0.0
      %342 = vmatpush2.msra.mxu0 0.0
      %343 = vmatprep.subr.mxu0 0.0
      %344 = vmatpush2.msra.mxu0 0.0
      %345 = vmatprep.subr.mxu0 0.0
      %346 = vmatpush2.msra.mxu0 0.0
      %347 = vmatprep.mubr.f32.mxu0 0.0
      %348 = vmatmul.mubr.f32.gmra.mxu0 %v279
      %v349 = vpop.f32.mrf.mxu0
      %v350 = vadd.f32 %v270, %v349
      %v351 = vpop.f32.mrf.mxu0
      %352 = vmatprep.mubr.f32.mxu0 0.0
      %353 = vmatmul.mubr.f32.gmra.mxu0 %v281
      %v354 = vpop.f32.mrf.mxu0
      %v355 = vadd.f32 %v275, %v354
      %v356 = vpop.f32.mrf.mxu0
      %357 = vdwg.mxu0
      %vm358 = vcmask 1046528
      %v359 = vrot.slane %v171, 1
      %v360 = vrot.slane %v172, 1
      %v361 = vsel %vm358, %v359, %v360
      %v363 = vsel %vm358, %v360, 0.0
      %s364 = scalar_lea.vmem %s1, 128
      %v365 = vld [vmem:[%s364] sm:$0xff]
      %v366 = vld [vmem:[%s364 + $0x8] sm:$0xff]
      %v367 = vld [vmem:[%s364 + $0x10] sm:$0xff]
      %v368 = vld [vmem:[%s364 + $0x18] sm:$0xff]
      %v369 = vld [vmem:[%s364 + $0x20] sm:$0xff]
      %v370 = vld [vmem:[%s364 + $0x28] sm:$0xff]
      %v371 = vld [vmem:[%s364 + $0x30] sm:$0xff]
      %v372 = vld [vmem:[%s364 + $0x38] sm:$0xff]
      %v373 = vsel %vm198, %v361, 0
      %v376 = vsel %vm198, %v363, 0
      %378 = vmatprep.subr.mxu0 0.0
      %379 = vmatpush1.msra.mxu0 0.0
      %380 = vmatprep.subr.mxu0 0.0
      %381 = vmatpush1.msra.mxu0 0.0
      %382 = vmatprep.subr.mxu0 0.0
      %383 = vmatpush1.msra.mxu0 0.0
      %384 = vmatprep.subr.mxu0 0.0
      %385 = vmatpush1.msra.mxu0 0.0
      %386 = vmatprep.subr.mxu0 0.0
      %387 = vmatpush1.msra.mxu0 0.0
      %388 = vmatprep.subr.mxu0 0.0
      %389 = vmatpush1.msra.mxu0 0.0
      %390 = vmatprep.subr.mxu0 0.0
      %391 = vmatpush1.msra.mxu0 0.0
      %392 = vmatprep.subr.mxu0 0.0
      %393 = vmatpush1.msra.mxu0 0.0
      %394 = vmatprep.subr.mxu0 0.0
      %395 = vmatpush1.msra.mxu0 %v372
      %396 = vmatprep.subr.mxu0 0.0
      %397 = vmatpush1.msra.mxu0 %v371
      %398 = vmatprep.subr.mxu0 0.0
      %399 = vmatpush1.msra.mxu0 %v370
      %400 = vmatprep.subr.mxu0 0.0
      %401 = vmatpush1.msra.mxu0 %v369
      %402 = vmatprep.subr.mxu0 0.0
      %403 = vmatpush1.msra.mxu0 %v368
      %404 = vmatprep.subr.mxu0 0.0
      %405 = vmatpush1.msra.mxu0 %v367
      %406 = vmatprep.subr.mxu0 0.0
      %407 = vmatpush1.msra.mxu0 %v366
      %408 = vmatprep.subr.mxu0 0.0
      %409 = vmatpush1.msra.mxu0 %v365
      %410 = vmatprep.subr.mxu0 0.0
      %411 = vmatpush2.msra.mxu0 0.0
      %412 = vmatprep.subr.mxu0 0.0
      %413 = vmatpush2.msra.mxu0 0.0
      %414 = vmatprep.subr.mxu0 0.0
      %415 = vmatpush2.msra.mxu0 0.0
      %416 = vmatprep.subr.mxu0 0.0
      %417 = vmatpush2.msra.mxu0 0.0
      %418 = vmatprep.subr.mxu0 0.0
      %419 = vmatpush2.msra.mxu0 0.0
      %420 = vmatprep.subr.mxu0 0.0
      %421 = vmatpush2.msra.mxu0 0.0
      %422 = vmatprep.subr.mxu0 0.0
      %423 = vmatpush2.msra.mxu0 0.0
      %424 = vmatprep.subr.mxu0 0.0
      %425 = vmatpush2.msra.mxu0 0.0
      %426 = vmatprep.subr.mxu0 0.0
      %427 = vmatpush2.msra.mxu0 0.0
      %428 = vmatprep.subr.mxu0 0.0
      %429 = vmatpush2.msra.mxu0 0.0
      %430 = vmatprep.subr.mxu0 0.0
      %431 = vmatpush2.msra.mxu0 0.0
      %432 = vmatprep.subr.mxu0 0.0
      %433 = vmatpush2.msra.mxu0 0.0
      %434 = vmatprep.subr.mxu0 0.0
      %435 = vmatpush2.msra.mxu0 0.0
      %436 = vmatprep.subr.mxu0 0.0
      %437 = vmatpush2.msra.mxu0 0.0
      %438 = vmatprep.subr.mxu0 0.0
      %439 = vmatpush2.msra.mxu0 0.0
      %440 = vmatprep.subr.mxu0 0.0
      %441 = vmatpush2.msra.mxu0 0.0
      %442 = vmatprep.mubr.f32.mxu0 0.0
      %443 = vmatmul.mubr.f32.gmra.mxu0 %v373
      %v444 = vpop.f32.mrf.mxu0
      %v445 = vadd.f32 0.0, %v444
      %v446 = vpop.f32.mrf.mxu0
      %447 = vmatprep.mubr.f32.mxu0 0.0
      %448 = vmatmul.mubr.f32.gmra.mxu0 %v376
      %v449 = vpop.f32.mrf.mxu0
      %v450 = vadd.f32 0.0, %v449
      %v451 = vpop.f32.mrf.mxu0
      %452 = vdwg.mxu0
      %v453 = vadd.f32 %v350, %v445
      %v454 = vadd.f32 %v355, %v450
      %v455 = vld [vmem:[%s2] sm:$0x1]
      %v457 = vlaneseq
      %v458 = vshrl.u32 %v457, 7
      %v459 = vsub.s32 0, %v458
      %v460 = vrot.slane %v455, %v459
      %v462 = vadd.f32 %v453, %v460
      %v463 = vadd.f32 %v454, %v460
      %v464 = vmax.f32 %v462, 0.0
      %v465 = vmax.f32 %v463, 0.0
      %466 = vst [vmem:[%s170] sm:$0xff] %v464
      %467 = vst [vmem:[%s170 + $0x8] sm:$0xff] %v465
      %p468 = scmp.lt.s32.totalorder %s14, 1
      %s469 = scalar_select %p468, %s14, 1
      %s470 = smul.addr %s469, 2
      %s471 = smul.addr %s470, 8
      %s472 = scalar_lea.vmem %s3, %s471
      // Predicated region
      $region33: #{_lambda_.1} parent=31 // pred_check
        %p473 = pneg %p100
      $region34: #{_lambda_.1} parent=31 // pred_check_branch
        %475 = sbr.rel (%p473) target = $region36
      $region35: #{_lambda_.1} parent=31 // pred_region
        _
      $region36: #{_lambda_.1} parent=31 // pred_fallthru
        _
    $region32: #{_lambda_.1} parent=5 // pred_fallthru
      _
    %p476 = scmp.le.s32.totalorder 2, %s9
    // Predicated region
    $region37: #{_lambda_.1} parent=5 // pred_check
      %p477 = pneg %p476
    $region38: #{_lambda_.1} parent=5 // pred_check_branch
      %479 = sbr.rel (%p477) target = $region40
    $region39: #{_lambda_.1} parent=5 // pred_region
      %s480 = ssub.s32 %s9, 2
      // Predicated region
      $region41: #{_lambda_.1} parent=39 // pred_check
        %p481 = pneg %p106
      $region42: #{_lambda_.1} parent=39 // pred_check_branch
        %483 = sbr.rel (%p481) target = $region44
      $region43: #{_lambda_.1} parent=39 // pred_region
        %p484 = scmp.lt.s32.totalorder %s15, 1
        %s485 = scalar_select %p484, %s15, 1
        %s486 = smul.addr %s485, 2
        %s487 = smul.addr %s486, 8
        %s488 = scalar_lea.vmem %s3, %s487
      $region44: #{_lambda_.1} parent=39 // pred_fallthru
        _
    $region40: #{_lambda_.1} parent=5 // pred_fallthru
      _
  $region6: #{_lambda_.1} parent=0 // loop_footer
    %s13 = sadd.s32 1, %s9
  $region7: #{_lambda_.1} parent=0 // loop_footer_branch
    %8 = sbr.rel target = $region3
  $region8: #{_lambda_.1} parent=0 // loop_exit
    _

</llo_original>
